<compile_context>
chip_gen: v7x
topology: tpu7x:2x2x1
jax: 0.10.0
libtpu: 0.0.40
codegen_flags: <defaults>
</compile_context>

<pallas_src>
import functools

import jax
import jax.numpy as jnp
from jax.experimental import pallas as pl
from jax.experimental.pallas import tpu as pltpu


def _ce_loss_kernel(s_ref, t_ref, o_ref, *, inv_temperature, apply_temp,
                    n_rows, tile_n, needs_mask):
    """One batch tile per grid step -> one per-tile partial sum of q*log_p."""
    i = pl.program_id(0)

    s = s_ref[...].astype(jnp.float32)
    tt = t_ref[...].astype(jnp.float32)
    if apply_temp:                      # compile-time branch: skip when T == 1
        s = s * inv_temperature
        tt = tt * inv_temperature
    # TODO(synk): on v7x, keep bf16 inputs in bf16 through scale/max-subtract
    # (bf16 VPU/EUP exist on v6e/v7x) to relieve the EUP slot after big tiles.

    # Student: stable log-sum-exp pieces (row-wise over the class/lane axis).
    s_max = jnp.max(s, axis=1, keepdims=True)
    s_shift = s - s_max
    lse_s = jnp.log(jnp.sum(jnp.exp(s_shift), axis=1, keepdims=True))

    # Teacher: softmax numerator pieces.
    t_max = jnp.max(tt, axis=1, keepdims=True)
    t_exp = jnp.exp(tt - t_max)
    t_sum = jnp.sum(t_exp, axis=1, keepdims=True)

    # Per-row contribution, using sum_j q_j == 1:
    #   sum_j q_j * log_p_j = (sum_j t_exp_j * s_shift_j) / (sum_j t_exp_j)
    #                         - lse_s
    num = jnp.sum(t_exp * s_shift, axis=1, keepdims=True)
    row = num * pl.reciprocal(t_sum, approx=False) - lse_s        # (tile_n, 1)

    def _write(rows):
        tile_sum = jnp.sum(rows)
        o_ref[...] = jnp.broadcast_to(tile_sum, o_ref.shape).astype(jnp.float32)

    if needs_mask:
        last = pl.num_programs(0) - 1

        @pl.when(i == last)
        def _():
            # Only the last tile has overhang rows (unspecified data); a
            # select (not multiply) zeroes them out, NaN/Inf-safe.
            row_idx = i * tile_n + jax.lax.broadcasted_iota(
                jnp.int32, (tile_n, 1), 0)
            _write(jnp.where(row_idx < n_rows, row, 0.0))

        @pl.when(i != last)
        def _():
            _write(row)
    else:
        _write(row)


def _vmem_budget_bytes():
    """(tile-sizing budget, compiler vmem_limit) — generation-aware."""
    try:
        cap = int(pltpu.get_tpu_info().vmem_capacity_bytes)
    except Exception:
        cap = 128 * 1024 * 1024
    if cap <= 64 * 1024 * 1024:                    # v7x: 64 MiB / TensorCore
        return 40 * 1024 * 1024, 48 * 1024 * 1024
    return 88 * 1024 * 1024, 100 * 1024 * 1024     # v5e / v6e: 128 MiB


def _pick_tile_n(n, c, itemsize_s, itemsize_t, budget_bytes):
    """Largest batch tile fitting the VMEM budget (double-buffered inputs +
    f32 temporaries), capped at ~16 MiB of combined input per grid step so
    DMA/compute still overlap for large N. No artificial row cap."""
    # bf16 packs 16 sublanes; derive row multiple from the NARROWER input.
    row_mult = 16 if min(itemsize_s, itemsize_t) < 4 else 8
    # Per row: 2 pipeline buffers per input (native dtype) + ~6 live full-tile
    # f32 temporaries inside the kernel.
    per_row_vmem = c * (2 * (itemsize_s + itemsize_t) + 6 * 4)
    tile = budget_bytes // per_row_vmem
    per_row_input = c * (itemsize_s + itemsize_t)
    tile = min(tile, (16 * 1024 * 1024) // per_row_input)
    tile = max(row_mult, (tile // row_mult) * row_mult)
    n_pad = ((n + row_mult - 1) // row_mult) * row_mult
    return min(tile, n_pad), row_mult


def ce_loss(output_batch, teacher_outputs, temperature=1.0, tile_n=None):
    """Pallas implementation of CE_Loss.forward.

    Args:
      output_batch:    [N, C] student logits (f32 or bf16).
      teacher_outputs: [N, C] teacher logits (f32 or bf16).
    Returns:
      scalar float32 loss.
    """
    assert output_batch.shape == teacher_outputs.shape
    assert output_batch.ndim == 2
    n, c = output_batch.shape
    itemsize_s = jnp.dtype(output_batch.dtype).itemsize
    itemsize_t = jnp.dtype(teacher_outputs.dtype).itemsize

    budget_bytes, vmem_limit = _vmem_budget_bytes()
    if tile_n is None:
        tile_n, _ = _pick_tile_n(n, c, itemsize_s, itemsize_t, budget_bytes)
    else:
        row_mult = 16 if min(itemsize_s, itemsize_t) < 4 else 8
        tile_n = max(row_mult, (int(tile_n) // row_mult) * row_mult)

    num_tiles = -(-n // tile_n)                    # ceil div
    needs_mask = (num_tiles * tile_n != n)         # partial last block

    # TODO(synk): for vocab-scale C (32k+), add an inner "arbitrary" class-dim
    # grid axis with an online logsumexp instead of one full-C block per tile.
    # TODO(synk): on v7x, profile per-core occupancy; switch the batch axis to
    # pltpu.CORE_PARALLEL if the "parallel" axis is not sharded across both TCs.

    kernel = functools.partial(
        _ce_loss_kernel,
        inv_temperature=1.0 / float(temperature),
        apply_temp=(float(temperature) != 1.0),
        n_rows=n,
        tile_n=tile_n,
        needs_mask=needs_mask,
    )

    cost = pl.CostEstimate(
        flops=10 * n * c,
        transcendentals=2 * n * c,
        bytes_accessed=n * c * (itemsize_s + itemsize_t)
        + num_tiles * 8 * 128 * 4,
    )

    partials = pl.pallas_call(
        kernel,
        out_shape=jax.ShapeDtypeStruct((num_tiles, 8, 128), jnp.float32),
        grid_spec=pltpu.PrefetchScalarGridSpec(
            num_scalar_prefetch=0,
            grid=(num_tiles,),
            in_specs=[
                pl.BlockSpec((tile_n, c), lambda i: (i, 0)),
                pl.BlockSpec((tile_n, c), lambda i: (i, 0)),
            ],
            out_specs=pl.BlockSpec((1, 8, 128), lambda i: (i, 0, 0)),
        ),
        compiler_params=pltpu.CompilerParams(
            dimension_semantics=("parallel",),
            vmem_limit_bytes=vmem_limit,
        ),
        cost_estimate=cost,
    )(output_batch, teacher_outputs)

    total = jnp.sum(partials[:, 0, 0])
    return (-(float(temperature) ** 2) * total / n).astype(jnp.float32)


def ce_loss_ref(output_batch, teacher_outputs, temperature=1.0):
    """Pure-JAX reference mirroring the PyTorch forward."""
    log_p = jax.nn.log_softmax(output_batch / temperature, axis=1)
    q = jax.nn.softmax(teacher_outputs / temperature, axis=1)
    n = teacher_outputs.shape[0]
    return -temperature * temperature * jnp.sum(log_p * q) / n


if __name__ == "__main__":
    key = jax.random.PRNGKey(0)
    k1, k2, k3, k4, k5, k6 = jax.random.split(key, 6)

    # Small [batch, num_classes] logits, consistent with the module.
    N, C, T = 16, 128, 2.0
    student = jax.random.normal(k1, (N, C), dtype=jnp.float32)
    teacher = jax.random.normal(k2, (N, C), dtype=jnp.float32)
    loss = jax.block_until_ready(ce_loss(student, teacher, temperature=T))
    ref = ce_loss_ref(student, teacher, temperature=T)
    assert jnp.allclose(loss, ref, rtol=1e-5, atol=1e-5), (loss, ref)

    # Ragged batch + T == 1 (exercises the no-pad partial last block, the
    # pl.when-gated row mask, and the skip-inv-T compile-time branch).
    N2, C2 = 12, 128
    student2 = jax.random.normal(k3, (N2, C2), dtype=jnp.float32)
    teacher2 = jax.random.normal(k4, (N2, C2), dtype=jnp.float32)
    loss2 = jax.block_until_ready(ce_loss(student2, teacher2, temperature=1.0))
    ref2 = ce_loss_ref(student2, teacher2, temperature=1.0)
    assert jnp.allclose(loss2, ref2, rtol=1e-5, atol=1e-4), (loss2, ref2)

    # bf16 inputs (exercises the 16-sublane row multiple).
    N3, C3, T3 = 24, 256, 2.0
    student3 = jax.random.normal(k5, (N3, C3), dtype=jnp.float32).astype(
        jnp.bfloat16)
    teacher3 = jax.random.normal(k6, (N3, C3), dtype=jnp.float32).astype(
        jnp.bfloat16)
    loss3 = jax.block_until_ready(ce_loss(student3, teacher3, temperature=T3))
    ref3 = ce_loss_ref(student3.astype(jnp.float32),
                       teacher3.astype(jnp.float32), temperature=T3)
    assert jnp.allclose(loss3, ref3, rtol=1e-4, atol=1e-3), (loss3, ref3)

    print("KERNEL_OK")
</pallas_src>

<mosaic_0001>
module attributes {stable_mosaic.version = 11 : i64} {
  func.func @_ce_loss_kernel(%arg0: i32, %arg1: memref<16x128xf32, #tpu.memory_space<vmem>>, %arg2: memref<16x128xf32, #tpu.memory_space<vmem>>, %arg3: memref<1x8x128xf32, #tpu.memory_space<vmem>>) attributes {dimension_semantics = [#tpu.dimension_semantics<parallel>], iteration_bounds = array<i64: 1>, scalar_prefetch = 0 : i64, scratch_operands = 0 : i64, tpu.core_type = #tpu.core_type<tc>, window_params = [{transform_indices = @transform_0, window_bounds = array<i64: 16, 128>}, {transform_indices = @transform_1, window_bounds = array<i64: 16, 128>}, {transform_indices = @transform_2, window_bounds = array<i64: 1, 8, 128>}]} {
    %c0 = arith.constant 0 : index
    %c0_0 = arith.constant 0 : index
    %0 = vector.load %arg1[%c0, %c0_0] : memref<16x128xf32, #tpu.memory_space<vmem>>, vector<16x128xf32>
    %c0_1 = arith.constant 0 : index
    %c0_2 = arith.constant 0 : index
    %1 = vector.load %arg2[%c0_1, %c0_2] : memref<16x128xf32, #tpu.memory_space<vmem>>, vector<16x128xf32>
    %cst = arith.constant 5.000000e-01 : f32
    %2 = vector.broadcast %cst : f32 to vector<16x128xf32>
    %3 = arith.mulf %0, %2 : vector<16x128xf32>
    %cst_3 = arith.constant 5.000000e-01 : f32
    %4 = vector.broadcast %cst_3 : f32 to vector<16x128xf32>
    %5 = arith.mulf %1, %4 : vector<16x128xf32>
    %cst_4 = arith.constant dense<0xFF800000> : vector<16xf32>
    %6 = vector.multi_reduction <maximumf>, %3, %cst_4 [1] : vector<16x128xf32> to vector<16xf32>
    %7 = vector.shape_cast %6 : vector<16xf32> to vector<16x1xf32>
    %8 = vector.broadcast %7 : vector<16x1xf32> to vector<16x128xf32>
    %9 = arith.subf %3, %8 : vector<16x128xf32>
    %10 = math.exp %9 : vector<16x128xf32>
    %cst_5 = arith.constant dense<0.000000e+00> : vector<16xf32>
    %11 = vector.multi_reduction <add>, %10, %cst_5 [1] : vector<16x128xf32> to vector<16xf32>
    %12 = vector.shape_cast %11 : vector<16xf32> to vector<16x1xf32>
    %13 = math.log %12 : vector<16x1xf32>
    %cst_6 = arith.constant dense<0xFF800000> : vector<16xf32>
    %14 = vector.multi_reduction <maximumf>, %5, %cst_6 [1] : vector<16x128xf32> to vector<16xf32>
    %15 = vector.shape_cast %14 : vector<16xf32> to vector<16x1xf32>
    %16 = vector.broadcast %15 : vector<16x1xf32> to vector<16x128xf32>
    %17 = arith.subf %5, %16 : vector<16x128xf32>
    %18 = math.exp %17 : vector<16x128xf32>
    %cst_7 = arith.constant dense<0.000000e+00> : vector<16xf32>
    %19 = vector.multi_reduction <add>, %18, %cst_7 [1] : vector<16x128xf32> to vector<16xf32>
    %20 = vector.shape_cast %19 : vector<16xf32> to vector<16x1xf32>
    %21 = arith.mulf %18, %9 : vector<16x128xf32>
    %cst_8 = arith.constant dense<0.000000e+00> : vector<16xf32>
    %22 = vector.multi_reduction <add>, %21, %cst_8 [1] : vector<16x128xf32> to vector<16xf32>
    %23 = vector.shape_cast %22 : vector<16xf32> to vector<16x1xf32>
    %24 = tpu.reciprocal %20 : vector<16x1xf32> -> vector<16x1xf32>
    %25 = arith.mulf %23, %24 : vector<16x1xf32>
    %26 = arith.subf %25, %13 : vector<16x1xf32>
    %27 = vector.shape_cast %26 : vector<16x1xf32> to vector<1x16x1xf32>
    %cst_9 = arith.constant dense<0.000000e+00> : vector<1xf32>
    %28 = vector.multi_reduction <add>, %27, %cst_9 [1, 2] : vector<1x16x1xf32> to vector<1xf32>
    %29 = vector.shape_cast %28 : vector<1xf32> to vector<1x1x1xf32>
    %30 = vector.extract %29[0, 0, 0] : f32 from vector<1x1x1xf32>
    %31 = vector.broadcast %30 : f32 to vector<1x8x128xf32>
    %c0_10 = arith.constant 0 : index
    %c0_11 = arith.constant 0 : index
    %c0_12 = arith.constant 0 : index
    %32 = vector.load %arg3[%c0_10, %c0_11, %c0_12] : memref<1x8x128xf32, #tpu.memory_space<vmem>>, vector<1x8x128xf32>
    tpu.vector_store %arg3[%c0_10, %c0_11, %c0_12], %31 {strides = array<i32>} : memref<1x8x128xf32, #tpu.memory_space<vmem>>, vector<1x8x128xf32>,
    return
  }
  func.func @transform_0(%arg0: i32) -> (i32, i32) {
    %c0_i32 = arith.constant 0 : i32
    %c0_i32_0 = arith.constant 0 : i32
    return %arg0, %c0_i32 : i32, i32
  }
  func.func @transform_1(%arg0: i32) -> (i32, i32) {
    %c0_i32 = arith.constant 0 : i32
    %c0_i32_0 = arith.constant 0 : i32
    return %arg0, %c0_i32 : i32, i32
  }
  func.func @transform_2(%arg0: i32) -> (i32, i32, i32) {
    %c0_i32 = arith.constant 0 : i32
    %c0_i32_0 = arith.constant 0 : i32
    %c0_i32_1 = arith.constant 0 : i32
    return %arg0, %c0_i32, %c0_i32_0 : i32, i32, i32
  }
}

</mosaic_0001>

<llo_original>
// kernel: tpu_custom_call.1
$region0: #{tpu_custom_call.1}
  #allocation0 [shape = 'u32[]', space=smem, size = 0x4, offset = 0x4, fixed_abs, tag = 'smem constant byte address 0x4 - core index']
  #allocation1 [shape = 'u32[144,128]{1,0:T(1,128)}', space=vmem, size = 0x12000, scoped, tag = 'internal scratch']
  %s0 = inlined_call_operand.hbm [shape: f32[16,128], index: 0, kind: input, shape index: {}]
  %s1 = inlined_call_operand.hbm [shape: f32[16,128], index: 1, kind: input, shape index: {}]
  %s2 = inlined_call_operand.hbm [shape: f32[1,8,128], index: 2, kind: output, shape index: {}]
  %s3 = sld [smem:[#allocation0]]
  $region26: #{tpu_custom_call.1} parent=0
    _
  %s5 = ssub.s32 1, %s3
  %s6 = scalar_select 0, %s5, %s3
  $region1: #{tpu_custom_call.1} parent=0
    #allocation2 [shape = 'u8[8192]{0}', space=vmem, size = 0x2000, scoped, tag = 'input window, operand 0, single buffered']
    #allocation3 [shape = 's32[1]{0}', space=sflag, size = 0x4, scoped, tag = 'scoped memory for tpu_custom_call.1']
    #allocation4 [shape = 's32[1]{0}', space=sflag, size = 0x4, scoped, tag = 'scoped memory for tpu_custom_call.1']
    #allocation5 [shape = 'u8[8192]{0}', space=vmem, size = 0x2000, scoped, tag = 'input window, operand 1, single buffered']
    #allocation6 [shape = 's32[1]{0}', space=sflag, size = 0x4, scoped, tag = 'scoped memory for tpu_custom_call.1']
    #allocation7 [shape = 'u8[4096]{0}', space=vmem, size = 0x1000, scoped, tag = 'output window, operand 0, single buffered']
    %7 = vsyncpa [#allocation3], 0
    %8 = vsyncpa [#allocation6], 0
    %9 = vsyncpa [#allocation4], 0
    // Predicated region
    $region2: #{tpu_custom_call.1} parent=1 // pred_check
      _
    $region3: #{tpu_custom_call.1} parent=1 // pred_check_branch
      %11 = sbr.rel (0) target = $region5
    $region4: #{tpu_custom_call.1} parent=1 // pred_region
      %s13 = ssub.s32 256, 256
      %14 = vsyncadd [#allocation3], %s13
      %s15 = sshll.u32 [#allocation2], 4
      %s16 = int_to_ptr.vmem [resolvable:$true] %s15
      %21 = dma.hbm_to_vmem [thread:$0]  %s0, 256, %s16, [#allocation3], 128, 128, 8
    $region5: #{tpu_custom_call.1} parent=1 // pred_fallthru
      _
    // Predicated region
    $region6: #{tpu_custom_call.1} parent=1 // pred_check
      _
    $region7: #{tpu_custom_call.1} parent=1 // pred_check_branch
      %23 = sbr.rel (0) target = $region9
    $region8: #{tpu_custom_call.1} parent=1 // pred_region
      %s25 = ssub.s32 256, 256
      %26 = vsyncadd [#allocation6], %s25
      %s27 = sshll.u32 [#allocation5], 4
      %s28 = int_to_ptr.vmem [resolvable:$true] %s27
      %33 = dma.hbm_to_vmem [thread:$0]  %s1, 256, %s28, [#allocation6], 128, 128, 8
    $region9: #{tpu_custom_call.1} parent=1 // pred_fallthru
      _
    // Predicated region
    $region10: #{tpu_custom_call.1} parent=1 // pred_check
      _
    $region11: #{tpu_custom_call.1} parent=1 // pred_check_branch
      %35 = sbr.rel (0) target = $region13
    $region12: #{tpu_custom_call.1} parent=1 // pred_region
      %36 = dma.done [#allocation3], 256
    $region13: #{tpu_custom_call.1} parent=1 // pred_fallthru
      _
    // Predicated region
    $region14: #{tpu_custom_call.1} parent=1 // pred_check
      _
    $region15: #{tpu_custom_call.1} parent=1 // pred_check_branch
      %38 = sbr.rel (0) target = $region17
    $region16: #{tpu_custom_call.1} parent=1 // pred_region
      %39 = dma.done [#allocation6], 256
    $region17: #{tpu_custom_call.1} parent=1 // pred_fallthru
      _
    %v40 = vld [vmem:[#allocation2] sm:$0xff]
    %v41 = vld [vmem:[#allocation2 + $0x8] sm:$0xff]
    %v42 = vld [vmem:[#allocation5] sm:$0xff]
    %v43 = vld [vmem:[#allocation5 + $0x8] sm:$0xff]
    %v44 = vmul.f32 %v40, 0.5
    %v45 = vmul.f32 %v41, 0.5
    %v46 = vmul.f32 %v42, 0.5
    %v47 = vmul.f32 %v43, 0.5
    %48 = vmax.xlane.f32.xlu0 %v44
    %v49 = vpop.xlane.xlu0 %48
    %50 = vmax.xlane.f32.xlu0 %v45
    %v51 = vpop.xlane.xlu0 %50
    %v52 = vsub.f32 %v44, %v49
    %v53 = vsub.f32 %v45, %v51
    %v54 = vmul.f32 %v52, 1.442695
    %v55 = vpow.pop %v54
    %v56 = vmul.f32 %v53, 1.442695
    %v57 = vpow.pop %v56
    %58 = vadd.xlane.f32.xlu0 %v55
    %v59 = vpop.xlane.xlu0 %58
    %60 = vadd.xlane.f32.xlu0 %v57
    %v61 = vpop.xlane.xlu0 %60
    %v62 = vlog2.pop %v59
    %v63 = vmul.f32 %v62, 0.6931472
    %v64 = vlog2.pop %v61
    %v65 = vmul.f32 %v64, 0.6931472
    %66 = vmax.xlane.f32.xlu0 %v46
    %v67 = vpop.xlane.xlu0 %66
    %68 = vmax.xlane.f32.xlu0 %v47
    %v69 = vpop.xlane.xlu0 %68
    %v70 = vsub.f32 %v46, %v67
    %v71 = vsub.f32 %v47, %v69
    %v72 = vmul.f32 %v70, 1.442695
    %v73 = vpow.pop %v72
    %v74 = vmul.f32 %v71, 1.442695
    %v75 = vpow.pop %v74
    %76 = vadd.xlane.f32.xlu0 %v73
    %v77 = vpop.xlane.xlu0 %76
    %78 = vadd.xlane.f32.xlu0 %v75
    %v79 = vpop.xlane.xlu0 %78
    %v80 = vmul.f32 %v73, %v52
    %v81 = vmul.f32 %v75, %v53
    %82 = vadd.xlane.f32.xlu0 %v80
    %v83 = vpop.xlane.xlu0 %82
    %84 = vadd.xlane.f32.xlu0 %v81
    %v85 = vpop.xlane.xlu0 %84
    %v86 = vrcp.pop %v77
    %v87 = vrcp.pop %v79
    %v88 = vmul.f32 %v83, %v86
    %v89 = vmul.f32 %v85, %v87
    %v90 = vsub.f32 %v88, %v63
    %v91 = vsub.f32 %v89, %v65
    %vm92 = vcmask 7168
    %v93 = vsel %vm92, %v90, 0.0
    %v94 = vsel %vm92, %v91, 0.0
    %v95 = vadd.f32 %v93, %v94
    %96 = vadd.xlane.f32.xlu0 %v95
    %v97 = vpop.xlane.xlu0 %96
    %v98 = vrot.slane %v97, 4
    %v99 = vadd.f32 %v97, %v98
    %v100 = vrot.slane %v99, 2
    %v101 = vadd.f32 %v99, %v100
    %v102 = vrot.slane %v101, 1
    %v103 = vadd.f32 %v101, %v102
    %s104 = vtos %v103
    %v105 = vstv %s104
    %106 = vst [vmem:[#allocation7] sm:$0xff] %v105
    // Predicated region
    $region18: #{tpu_custom_call.1} parent=1 // pred_check
      _
    $region19: #{tpu_custom_call.1} parent=1 // pred_check_branch
      %108 = sbr.rel (0) target = $region21
    $region20: #{tpu_custom_call.1} parent=1 // pred_region
      %s110 = ssub.s32 128, 128
      %111 = vsyncadd [#allocation4], %s110
      %s113 = sshll.u32 [#allocation7], 4
      %s114 = int_to_ptr.vmem [resolvable:$true] %s113
      %116 = dma.vmem_to_hbm [thread:$0]  %s114, 128, %s2, [#allocation4]
    $region21: #{tpu_custom_call.1} parent=1 // pred_fallthru
      _
    // Predicated region
    $region22: #{tpu_custom_call.1} parent=1 // pred_check
      _
    $region23: #{tpu_custom_call.1} parent=1 // pred_check_branch
      %118 = sbr.rel (0) target = $region25
    $region24: #{tpu_custom_call.1} parent=1 // pred_region
      %119 = dma.done [#allocation4], 128
    $region25: #{tpu_custom_call.1} parent=1 // pred_fallthru
      _
    %120 = vsyncpa [#allocation3], 1
    %121 = vsyncpa [#allocation6], 1
    %122 = vsyncpa [#allocation4], 1

</llo_original>
